<compile_context>
chip_gen: v7x
topology: tpu7x:2x2x1
jax: 0.10.0
libtpu: 0.0.40
codegen_flags: <defaults>
</compile_context>

<pallas_src>
import functools

import jax
import jax.numpy as jnp
from jax import lax
from jax.experimental import pallas as pl
from jax.experimental.pallas import tpu as pltpu

_LANES = 128
_SUBLANES = 8
_MACRO_ROWS = 32            # chunk rows: whole packing tiles for int8/bf16/f32
_ROW_QUANTUM = 32
_TARGET_BLOCK_BYTES = 4 << 20   # ~4 MiB logits block per tile


def _cdiv(a, b):
    return -(-a // b)


def _round_up(x, m):
    return (x + m - 1) // m * m


def _fold_to_sublane(x):
    """(k*8, 128) -> (8, 128) by summing 8-row groups (cheap VALU adds)."""
    r = x[0:_SUBLANES]
    for g in range(_SUBLANES, x.shape[0], _SUBLANES):
        r = r + x[g:g + _SUBLANES]
    return r


def _dice_partial_kernel(logits_ref, tgt_ref, out_ref,
                         inter_acc, psum_acc, tsum_acc, *,
                         num_valid, masked):
    """Per-batch-element per-class (intersection, prob-sum, target-count).

    logits_ref: (C, block_rows, 128)   tgt_ref: (block_rows, 128) int8/int32
    out_ref:    (3, C) f32             scratch: three (C, 8, 128) f32
    Grid: (batch, pixel_tiles); scratch accumulates across the tile axis.
    """
    num_classes, block_rows, _ = logits_ref.shape
    t = pl.program_id(1)

    @pl.when(t == 0)
    def _init():
        inter_acc[...] = jnp.zeros_like(inter_acc)
        psum_acc[...] = jnp.zeros_like(psum_acc)
        tsum_acc[...] = jnp.zeros_like(tsum_acc)

    def softmax_terms(xs, tgt, valid):
        """xs: list of C (r,128) f32; tgt: (r,128) i32; valid: bool mask/None."""
        if valid is not None:
            # Zero garbage/padded logits BEFORE exp so OOB data can't make NaNs.
            xs = [jnp.where(valid, x, 0.0) for x in xs]
            tgt = jnp.where(valid, tgt, -1)
        m = xs[0]
        for c in range(1, num_classes):
            m = jnp.maximum(m, xs[c])
        es = [jnp.exp(x - m) for x in xs]
        denom = es[0]
        for c in range(1, num_classes):
            denom = denom + es[c]
        # EUP reciprocal seed + one Newton step (~1-2 ulp of an exact divide).
        inv = pl.reciprocal(denom, approx=True)
        inv = inv * (2.0 - denom * inv)
        if valid is not None:
            inv = inv * valid.astype(jnp.float32)   # no prob mass on padding
        return es, inv, tgt

    if block_rows % _MACRO_ROWS == 0:
        # ---- main path: fori_loop over 32-row chunks, register carries ----
        num_chunks = block_rows // _MACRO_ROWS
        if masked:
            row_ids = lax.broadcasted_iota(jnp.int32, (_MACRO_ROWS, _LANES), 0)
            lane_ids = lax.broadcasted_iota(jnp.int32, (_MACRO_ROWS, _LANES), 1)
            chunk_off = row_ids * _LANES + lane_ids        # hoisted, loop-invariant
            tile_base = t * (block_rows * _LANES)

        def chunk_body(j, carry):
            inter_c, psum_c, tsum_c = carry
            r0 = pl.multiple_of(j * _MACRO_ROWS, _MACRO_ROWS)
            xs = [logits_ref[c, pl.ds(r0, _MACRO_ROWS), :].astype(jnp.float32)
                  for c in range(num_classes)]
            tgt = tgt_ref[pl.ds(r0, _MACRO_ROWS), :].astype(jnp.int32)
            valid = None
            if masked:
                pix = tile_base + r0 * _LANES + chunk_off
                valid = pix < num_valid
            es, inv, tgt = softmax_terms(xs, tgt, valid)
            new_inter, new_psum, new_tsum = [], [], []
            for c in range(num_classes):
                p = es[c] * inv
                oh = (tgt == c).astype(jnp.float32)
                new_inter.append(inter_c[c] + _fold_to_sublane(p * oh))
                new_psum.append(psum_c[c] + _fold_to_sublane(p))
                new_tsum.append(tsum_c[c] + _fold_to_sublane(oh))
            return tuple(new_inter), tuple(new_psum), tuple(new_tsum)

        zeros = tuple(jnp.zeros((_SUBLANES, _LANES), jnp.float32)
                      for _ in range(num_classes))
        inter_carry, psum_carry, tsum_carry = lax.fori_loop(
            0, num_chunks, chunk_body, (zeros, zeros, zeros), unroll=2)

        # One small RMW per class per tile instead of one per vreg.
        for c in range(num_classes):
            inter_acc[c] = inter_acc[c] + inter_carry[c]
            psum_acc[c] = psum_acc[c] + psum_carry[c]
            tsum_acc[c] = tsum_acc[c] + tsum_carry[c]
    else:
        # ---- tiny path: block_rows < 32 (single small tile), one shot ----
        xs = [logits_ref[c, 0:block_rows, :].astype(jnp.float32)
              for c in range(num_classes)]
        tgt = tgt_ref[0:block_rows, :].astype(jnp.int32)
        valid = None
        if masked:
            row_ids = lax.broadcasted_iota(jnp.int32, (block_rows, _LANES), 0)
            lane_ids = lax.broadcasted_iota(jnp.int32, (block_rows, _LANES), 1)
            pix = t * (block_rows * _LANES) + row_ids * _LANES + lane_ids
            valid = pix < num_valid
        es, inv, tgt = softmax_terms(xs, tgt, valid)
        for c in range(num_classes):
            p = es[c] * inv
            oh = (tgt == c).astype(jnp.float32)
            ip = p * oh
            for g0 in range(0, block_rows, _SUBLANES):
                g1 = min(block_rows, g0 + _SUBLANES)
                k = g1 - g0
                inter_acc[c, 0:k, :] = inter_acc[c, 0:k, :] + ip[g0:g1]
                psum_acc[c, 0:k, :] = psum_acc[c, 0:k, :] + p[g0:g1]
                tsum_acc[c, 0:k, :] = tsum_acc[c, 0:k, :] + oh[g0:g1]

    @pl.when(t == pl.num_programs(1) - 1)
    def _finalize():
        # Sublane-reduce first, then the lane reduce on only (C, 128).
        inter_tot = jnp.sum(jnp.sum(inter_acc[...], axis=1), axis=-1)   # (C,)
        psum_tot = jnp.sum(jnp.sum(psum_acc[...], axis=1), axis=-1)     # (C,)
        tsum_tot = jnp.sum(jnp.sum(tsum_acc[...], axis=1), axis=-1)     # (C,)
        out_ref[0:1, :] = inter_tot[None, :]
        out_ref[1:2, :] = psum_tot[None, :]
        out_ref[2:3, :] = tsum_tot[None, :]


def dice_loss(logits, targets, smooth=1e-6):
    """logits: (N, C, H, W) f32/bf16, targets: (N, H, W) int -> scalar loss."""
    N, C, H, W = logits.shape
    HW = H * W
    rows = _cdiv(HW, _LANES)
    itemsize = jnp.dtype(logits.dtype).itemsize
    tgt_dtype = jnp.int8 if C <= 127 else jnp.int32

    # Copy-free views in the native (N, C, ...) order (no HBM transpose).
    logits3 = logits.reshape(N, C, HW)
    tgt2 = targets.reshape(N, HW).astype(tgt_dtype)
    hw_pad = rows * _LANES
    if hw_pad != HW:
        # Only needed when H*W is not a multiple of 128; masked in-kernel.
        logits3 = jnp.pad(logits3, ((0, 0), (0, 0), (0, hw_pad - HW)))
        tgt2 = jnp.pad(tgt2, ((0, 0), (0, hw_pad - HW)))
    logits4 = logits3.reshape(N, C, rows, _LANES)
    tgt3 = tgt2.reshape(N, rows, _LANES)

    # Rows of 128 pixels per tile: ~4 MiB of logits (dtype-aware), multiples of
    # 32 rows so int8 targets / bf16 logits slice on whole packing tiles.
    row_bytes = C * _LANES * itemsize
    cap = max(_ROW_QUANTUM,
              (_TARGET_BLOCK_BYTES // row_bytes) // _ROW_QUANTUM * _ROW_QUANTUM)
    if rows < _ROW_QUANTUM:
        block_rows = rows                       # single full-extent tiny block
    else:
        nt = _cdiv(rows, cap)
        block_rows = min(_round_up(_cdiv(rows, nt), _ROW_QUANTUM),
                         rows // _ROW_QUANTUM * _ROW_QUANTUM)
    num_tiles = _cdiv(rows, block_rows)
    # Mask only when padded pixels or a partial trailing grid block exist.
    masked = (num_tiles * block_rows * _LANES) != HW

    kernel = functools.partial(_dice_partial_kernel, num_valid=HW, masked=masked)

    vmem_need = (2 * C * block_rows * _LANES * itemsize
                 + 2 * block_rows * _LANES * jnp.dtype(tgt_dtype).itemsize
                 + 3 * C * _SUBLANES * _LANES * 4)
    vmem_limit = int(max(32 << 20, vmem_need + (4 << 20)))

    partials = pl.pallas_call(
        kernel,
        out_shape=jax.ShapeDtypeStruct((N, 3, C), jnp.float32),
        grid_spec=pltpu.PrefetchScalarGridSpec(
            num_scalar_prefetch=0,
            grid=(N, num_tiles),
            in_specs=[
                pl.BlockSpec((None, C, block_rows, _LANES),
                             lambda n, t: (n, 0, t, 0)),
                pl.BlockSpec((None, block_rows, _LANES),
                             lambda n, t: (n, t, 0)),
            ],
            out_specs=pl.BlockSpec((None, 3, C), lambda n, t: (n, 0, 0)),
            scratch_shapes=[
                pltpu.VMEM((C, _SUBLANES, _LANES), jnp.float32),  # intersection
                pltpu.VMEM((C, _SUBLANES, _LANES), jnp.float32),  # prob sum
                pltpu.VMEM((C, _SUBLANES, _LANES), jnp.float32),  # target count
            ],
        ),
        compiler_params=pltpu.CompilerParams(
            dimension_semantics=("parallel", "arbitrary"),
            vmem_limit_bytes=vmem_limit),
    )(logits4, tgt3)

    # Tiny epilogue in plain JAX: combine per-batch partials and form the loss.
    inter = jnp.sum(partials[:, 0, :], axis=0)
    psum = jnp.sum(partials[:, 1, :], axis=0)
    tsum = jnp.sum(partials[:, 2, :], axis=0)
    dice = (2.0 * inter + smooth) / (psum + tsum + smooth)
    return jnp.mean(1.0 - dice)


def _dice_loss_ref(logits, targets, smooth=1e-6):
    C = logits.shape[1]
    probs = jax.nn.softmax(logits.astype(jnp.float32), axis=1)
    onehot = jnp.transpose(
        jax.nn.one_hot(targets, C, dtype=jnp.float32), (0, 3, 1, 2))
    inter = jnp.sum(probs * onehot, axis=(0, 2, 3))
    union = jnp.sum(probs, axis=(0, 2, 3)) + jnp.sum(onehot, axis=(0, 2, 3))
    dice = (2.0 * inter + smooth) / (union + smooth)
    return jnp.mean(1.0 - dice)


if __name__ == "__main__":
    key = jax.random.PRNGKey(0)
    ks = jax.random.split(key, 8)

    # Case 1: lane-aligned, tiny (single full-extent block, no masking).
    N, C, H, W = 2, 4, 16, 16
    logits = jax.random.normal(ks[0], (N, C, H, W), dtype=jnp.float32)
    targets = jax.random.randint(ks[1], (N, H, W), 0, C, dtype=jnp.int32)
    loss = jax.block_until_ready(dice_loss(logits, targets))
    ref = jax.block_until_ready(_dice_loss_ref(logits, targets))
    assert jnp.allclose(loss, ref, atol=1e-5, rtol=1e-5), (loss, ref)

    # Case 2: ragged spatial size (padded + iota-masked tail).
    N2, C2, H2, W2 = 2, 3, 10, 10
    logits2 = jax.random.normal(ks[2], (N2, C2, H2, W2), dtype=jnp.float32)
    targets2 = jax.random.randint(ks[3], (N2, H2, W2), 0, C2, dtype=jnp.int32)
    loss2 = jax.block_until_ready(dice_loss(logits2, targets2))
    ref2 = jax.block_until_ready(_dice_loss_ref(logits2, targets2))
    assert jnp.allclose(loss2, ref2, atol=1e-5, rtol=1e-5), (loss2, ref2)

    # Case 3: exercises the chunked fori_loop path (no masking).
    N3, C3, H3, W3 = 2, 4, 64, 64
    logits3 = jax.random.normal(ks[4], (N3, C3, H3, W3), dtype=jnp.float32)
    targets3 = jax.random.randint(ks[5], (N3, H3, W3), 0, C3, dtype=jnp.int32)
    loss3 = jax.block_until_ready(dice_loss(logits3, targets3))
    ref3 = jax.block_until_ready(_dice_loss_ref(logits3, targets3))
    assert jnp.allclose(loss3, ref3, atol=1e-5, rtol=1e-5), (loss3, ref3)

    # Case 4: chunked path + partial trailing grid block + masking.
    N4, C4, H4, W4 = 1, 5, 96, 96
    logits4 = jax.random.normal(ks[6], (N4, C4, H4, W4), dtype=jnp.float32)
    targets4 = jax.random.randint(ks[7], (N4, H4, W4), 0, C4, dtype=jnp.int32)
    loss4 = jax.block_until_ready(dice_loss(logits4, targets4))
    ref4 = jax.block_until_ready(_dice_loss_ref(logits4, targets4))
    assert jnp.allclose(loss4, ref4, atol=1e-5, rtol=1e-5), (loss4, ref4)

    print("KERNEL_OK")
</pallas_src>

<mosaic_0001>
module attributes {stable_mosaic.version = 11 : i64} {
  func.func @_dice_partial_kernel(%arg0: i32, %arg1: i32, %arg2: memref<1x4x2x128xf32, #tpu.memory_space<vmem>>, %arg3: memref<1x2x128xi8, #tpu.memory_space<vmem>>, %arg4: memref<1x3x4xf32, #tpu.memory_space<vmem>>, %arg5: memref<4x8x128xf32, #tpu.memory_space<vmem>>, %arg6: memref<4x8x128xf32, #tpu.memory_space<vmem>>, %arg7: memref<4x8x128xf32, #tpu.memory_space<vmem>>) attributes {dimension_semantics = [#tpu.dimension_semantics<parallel>, #tpu.dimension_semantics<arbitrary>], iteration_bounds = array<i64: 2, 1>, scalar_prefetch = 0 : i64, scratch_operands = 3 : i64, tpu.core_type = #tpu.core_type<tc>, window_params = [{transform_indices = @transform_0, window_bounds = array<i64: 1, 4, 2, 128>}, {transform_indices = @transform_1, window_bounds = array<i64: 1, 2, 128>}, {transform_indices = @transform_2, window_bounds = array<i64: 1, 3, 4>}]} {
    %c0_i32 = arith.constant 0 : i32
    %0 = arith.cmpi eq, %arg1, %c0_i32 : i32
    %1 = arith.extui %0 : i1 to i32
    %c0_i32_0 = arith.constant 0 : i32
    %2 = arith.cmpi ne, %1, %c0_i32_0 : i32
    scf.if %2 {
      %cst_91 = arith.constant 0.000000e+00 : f32
      %132 = vector.broadcast %cst_91 : f32 to vector<4x8x128xf32>
      %c0_92 = arith.constant 0 : index
      %c0_93 = arith.constant 0 : index
      %c0_94 = arith.constant 0 : index
      %133 = vector.load %arg5[%c0_92, %c0_93, %c0_94] : memref<4x8x128xf32, #tpu.memory_space<vmem>>, vector<4x8x128xf32>
      tpu.vector_store %arg5[%c0_92, %c0_93, %c0_94], %132 {strides = array<i32>} : memref<4x8x128xf32, #tpu.memory_space<vmem>>, vector<4x8x128xf32>,
      %cst_95 = arith.constant 0.000000e+00 : f32
      %134 = vector.broadcast %cst_95 : f32 to vector<4x8x128xf32>
      %c0_96 = arith.constant 0 : index
      %c0_97 = arith.constant 0 : index
      %c0_98 = arith.constant 0 : index
      %135 = vector.load %arg6[%c0_96, %c0_97, %c0_98] : memref<4x8x128xf32, #tpu.memory_space<vmem>>, vector<4x8x128xf32>
      tpu.vector_store %arg6[%c0_96, %c0_97, %c0_98], %134 {strides = array<i32>} : memref<4x8x128xf32, #tpu.memory_space<vmem>>, vector<4x8x128xf32>,
      %cst_99 = arith.constant 0.000000e+00 : f32
      %136 = vector.broadcast %cst_99 : f32 to vector<4x8x128xf32>
      %c0_100 = arith.constant 0 : index
      %c0_101 = arith.constant 0 : index
      %c0_102 = arith.constant 0 : index
      %137 = vector.load %arg7[%c0_100, %c0_101, %c0_102] : memref<4x8x128xf32, #tpu.memory_space<vmem>>, vector<4x8x128xf32>
      tpu.vector_store %arg7[%c0_100, %c0_101, %c0_102], %136 {strides = array<i32>} : memref<4x8x128xf32, #tpu.memory_space<vmem>>, vector<4x8x128xf32>,
    } else {
    }
    %c0 = arith.constant 0 : index
    %c0_1 = arith.constant 0 : index
    %c0_2 = arith.constant 0 : index
    %c0_3 = arith.constant 0 : index
    %3 = vector.load %arg2[%c0, %c0_1, %c0_2, %c0_3] : memref<1x4x2x128xf32, #tpu.memory_space<vmem>>, vector<1x1x2x128xf32>
    %4 = vector.shape_cast %3 : vector<1x1x2x128xf32> to vector<2x128xf32>
    %c0_4 = arith.constant 0 : index
    %c1 = arith.constant 1 : index
    %c0_5 = arith.constant 0 : index
    %c0_6 = arith.constant 0 : index
    %5 = vector.load %arg2[%c0_4, %c1, %c0_5, %c0_6] : memref<1x4x2x128xf32, #tpu.memory_space<vmem>>, vector<1x1x2x128xf32>
    %6 = vector.shape_cast %5 : vector<1x1x2x128xf32> to vector<2x128xf32>
    %c0_7 = arith.constant 0 : index
    %c2 = arith.constant 2 : index
    %c0_8 = arith.constant 0 : index
    %c0_9 = arith.constant 0 : index
    %7 = vector.load %arg2[%c0_7, %c2, %c0_8, %c0_9] : memref<1x4x2x128xf32, #tpu.memory_space<vmem>>, vector<1x1x2x128xf32>
    %8 = vector.shape_cast %7 : vector<1x1x2x128xf32> to vector<2x128xf32>
    %c0_10 = arith.constant 0 : index
    %c3 = arith.constant 3 : index
    %c0_11 = arith.constant 0 : index
    %c0_12 = arith.constant 0 : index
    %9 = vector.load %arg2[%c0_10, %c3, %c0_11, %c0_12] : memref<1x4x2x128xf32, #tpu.memory_space<vmem>>, vector<1x1x2x128xf32>
    %10 = vector.shape_cast %9 : vector<1x1x2x128xf32> to vector<2x128xf32>
    %c0_13 = arith.constant 0 : index
    %c0_14 = arith.constant 0 : index
    %c0_15 = arith.constant 0 : index
    %11 = vector.load %arg3[%c0_13, %c0_14, %c0_15] : memref<1x2x128xi8, #tpu.memory_space<vmem>>, vector<1x2x128xi8>
    %12 = vector.shape_cast %11 : vector<1x2x128xi8> to vector<2x128xi8>
    %13 = arith.extsi %12 : vector<2x128xi8> to vector<2x128xi32>
    %14 = arith.maximumf %4, %6 : vector<2x128xf32>
    %15 = arith.maximumf %14, %8 : vector<2x128xf32>
    %16 = arith.maximumf %15, %10 : vector<2x128xf32>
    %17 = arith.subf %4, %16 : vector<2x128xf32>
    %18 = math.exp %17 : vector<2x128xf32>
    %19 = arith.subf %6, %16 : vector<2x128xf32>
    %20 = math.exp %19 : vector<2x128xf32>
    %21 = arith.subf %8, %16 : vector<2x128xf32>
    %22 = math.exp %21 : vector<2x128xf32>
    %23 = arith.subf %10, %16 : vector<2x128xf32>
    %24 = math.exp %23 : vector<2x128xf32>
    %25 = arith.addf %18, %20 : vector<2x128xf32>
    %26 = arith.addf %25, %22 : vector<2x128xf32>
    %27 = arith.addf %26, %24 : vector<2x128xf32>
    %28 = tpu.reciprocal %27 {approx = true} : vector<2x128xf32> -> vector<2x128xf32>
    %29 = arith.mulf %27, %28 : vector<2x128xf32>
    %cst = arith.constant 2.000000e+00 : f32
    %30 = vector.broadcast %cst : f32 to vector<2x128xf32>
    %31 = arith.subf %30, %29 : vector<2x128xf32>
    %32 = arith.mulf %28, %31 : vector<2x128xf32>
    %33 = arith.mulf %18, %32 : vector<2x128xf32>
    %c0_i32_16 = arith.constant 0 : i32
    %34 = vector.broadcast %c0_i32_16 : i32 to vector<2x128xi32>
    %35 = arith.cmpi eq, %13, %34 : vector<2x128xi32>
    %36 = arith.extui %35 : vector<2x128xi1> to vector<2x128xi32>
    %37 = arith.sitofp %36 : vector<2x128xi32> to vector<2x128xf32>
    %38 = arith.mulf %33, %37 : vector<2x128xf32>
    %c0_17 = arith.constant 0 : index
    %c0_18 = arith.constant 0 : index
    %c0_19 = arith.constant 0 : index
    %39 = vector.load %arg5[%c0_17, %c0_18, %c0_19] : memref<4x8x128xf32, #tpu.memory_space<vmem>>, vector<1x2x128xf32>
    %40 = vector.shape_cast %39 : vector<1x2x128xf32> to vector<2x128xf32>
    %41 = arith.addf %40, %38 : vector<2x128xf32>
    %c0_20 = arith.constant 0 : index
    %c0_21 = arith.constant 0 : index
    %c0_22 = arith.constant 0 : index
    %42 = vector.load %arg5[%c0_20, %c0_21, %c0_22] : memref<4x8x128xf32, #tpu.memory_space<vmem>>, vector<1x2x128xf32>
    %43 = vector.shape_cast %42 : vector<1x2x128xf32> to vector<2x128xf32>
    %44 = vector.shape_cast %41 : vector<2x128xf32> to vector<1x2x128xf32>
    tpu.vector_store %arg5[%c0_20, %c0_21, %c0_22], %44 {strides = array<i32>} : memref<4x8x128xf32, #tpu.memory_space<vmem>>, vector<1x2x128xf32>,
    %c0_23 = arith.constant 0 : index
    %c0_24 = arith.constant 0 : index
    %c0_25 = arith.constant 0 : index
    %45 = vector.load %arg6[%c0_23, %c0_24, %c0_25] : memref<4x8x128xf32, #tpu.memory_space<vmem>>, vector<1x2x128xf32>
    %46 = vector.shape_cast %45 : vector<1x2x128xf32> to vector<2x128xf32>
    %47 = arith.addf %46, %33 : vector<2x128xf32>
    %c0_26 = arith.constant 0 : index
    %c0_27 = arith.constant 0 : index
    %c0_28 = arith.constant 0 : index
    %48 = vector.load %arg6[%c0_26, %c0_27, %c0_28] : memref<4x8x128xf32, #tpu.memory_space<vmem>>, vector<1x2x128xf32>
    %49 = vector.shape_cast %48 : vector<1x2x128xf32> to vector<2x128xf32>
    %50 = vector.shape_cast %47 : vector<2x128xf32> to vector<1x2x128xf32>
    tpu.vector_store %arg6[%c0_26, %c0_27, %c0_28], %50 {strides = array<i32>} : memref<4x8x128xf32, #tpu.memory_space<vmem>>, vector<1x2x128xf32>,
    %c0_29 = arith.constant 0 : index
    %c0_30 = arith.constant 0 : index
    %c0_31 = arith.constant 0 : index
    %51 = vector.load %arg7[%c0_29, %c0_30, %c0_31] : memref<4x8x128xf32, #tpu.memory_space<vmem>>, vector<1x2x128xf32>
    %52 = vector.shape_cast %51 : vector<1x2x128xf32> to vector<2x128xf32>
    %53 = arith.addf %52, %37 : vector<2x128xf32>
    %c0_32 = arith.constant 0 : index
    %c0_33 = arith.constant 0 : index
    %c0_34 = arith.constant 0 : index
    %54 = vector.load %arg7[%c0_32, %c0_33, %c0_34] : memref<4x8x128xf32, #tpu.memory_space<vmem>>, vector<1x2x128xf32>
    %55 = vector.shape_cast %54 : vector<1x2x128xf32> to vector<2x128xf32>
    %56 = vector.shape_cast %53 : vector<2x128xf32> to vector<1x2x128xf32>
    tpu.vector_store %arg7[%c0_32, %c0_33, %c0_34], %56 {strides = array<i32>} : memref<4x8x128xf32, #tpu.memory_space<vmem>>, vector<1x2x128xf32>,
    %57 = arith.mulf %20, %32 : vector<2x128xf32>
    %c1_i32 = arith.constant 1 : i32
    %58 = vector.broadcast %c1_i32 : i32 to vector<2x128xi32>
    %59 = arith.cmpi eq, %13, %58 : vector<2x128xi32>
    %60 = arith.extui %59 : vector<2x128xi1> to vector<2x128xi32>
    %61 = arith.sitofp %60 : vector<2x128xi32> to vector<2x128xf32>
    %62 = arith.mulf %57, %61 : vector<2x128xf32>
    %c1_35 = arith.constant 1 : index
    %c0_36 = arith.constant 0 : index
    %c0_37 = arith.constant 0 : index
    %63 = vector.load %arg5[%c1_35, %c0_36, %c0_37] : memref<4x8x128xf32, #tpu.memory_space<vmem>>, vector<1x2x128xf32>
    %64 = vector.shape_cast %63 : vector<1x2x128xf32> to vector<2x128xf32>
    %65 = arith.addf %64, %62 : vector<2x128xf32>
    %c1_38 = arith.constant 1 : index
    %c0_39 = arith.constant 0 : index
    %c0_40 = arith.constant 0 : index
    %66 = vector.load %arg5[%c1_38, %c0_39, %c0_40] : memref<4x8x128xf32, #tpu.memory_space<vmem>>, vector<1x2x128xf32>
    %67 = vector.shape_cast %66 : vector<1x2x128xf32> to vector<2x128xf32>
    %68 = vector.shape_cast %65 : vector<2x128xf32> to vector<1x2x128xf32>
    tpu.vector_store %arg5[%c1_38, %c0_39, %c0_40], %68 {strides = array<i32>} : memref<4x8x128xf32, #tpu.memory_space<vmem>>, vector<1x2x128xf32>,
    %c1_41 = arith.constant 1 : index
    %c0_42 = arith.constant 0 : index
    %c0_43 = arith.constant 0 : index
    %69 = vector.load %arg6[%c1_41, %c0_42, %c0_43] : memref<4x8x128xf32, #tpu.memory_space<vmem>>, vector<1x2x128xf32>
    %70 = vector.shape_cast %69 : vector<1x2x128xf32> to vector<2x128xf32>
    %71 = arith.addf %70, %57 : vector<2x128xf32>
    %c1_44 = arith.constant 1 : index
    %c0_45 = arith.constant 0 : index
    %c0_46 = arith.constant 0 : index
    %72 = vector.load %arg6[%c1_44, %c0_45, %c0_46] : memref<4x8x128xf32, #tpu.memory_space<vmem>>, vector<1x2x128xf32>
    %73 = vector.shape_cast %72 : vector<1x2x128xf32> to vector<2x128xf32>
    %74 = vector.shape_cast %71 : vector<2x128xf32> to vector<1x2x128xf32>
    tpu.vector_store %arg6[%c1_44, %c0_45, %c0_46], %74 {strides = array<i32>} : memref<4x8x128xf32, #tpu.memory_space<vmem>>, vector<1x2x128xf32>,
    %c1_47 = arith.constant 1 : index
    %c0_48 = arith.constant 0 : index
    %c0_49 = arith.constant 0 : index
    %75 = vector.load %arg7[%c1_47, %c0_48, %c0_49] : memref<4x8x128xf32, #tpu.memory_space<vmem>>, vector<1x2x128xf32>
    %76 = vector.shape_cast %75 : vector<1x2x128xf32> to vector<2x128xf32>
    %77 = arith.addf %76, %61 : vector<2x128xf32>
    %c1_50 = arith.constant 1 : index
    %c0_51 = arith.constant 0 : index
    %c0_52 = arith.constant 0 : index
    %78 = vector.load %arg7[%c1_50, %c0_51, %c0_52] : memref<4x8x128xf32, #tpu.memory_space<vmem>>, vector<1x2x128xf32>
    %79 = vector.shape_cast %78 : vector<1x2x128xf32> to vector<2x128xf32>
    %80 = vector.shape_cast %77 : vector<2x128xf32> to vector<1x2x128xf32>
    tpu.vector_store %arg7[%c1_50, %c0_51, %c0_52], %80 {strides = array<i32>} : memref<4x8x128xf32, #tpu.memory_space<vmem>>, vector<1x2x128xf32>,
    %81 = arith.mulf %22, %32 : vector<2x128xf32>
    %c2_i32 = arith.constant 2 : i32
    %82 = vector.broadcast %c2_i32 : i32 to vector<2x128xi32>
    %83 = arith.cmpi eq, %13, %82 : vector<2x128xi32>
    %84 = arith.extui %83 : vector<2x128xi1> to vector<2x128xi32>
    %85 = arith.sitofp %84 : vector<2x128xi32> to vector<2x128xf32>
    %86 = arith.mulf %81, %85 : vector<2x128xf32>
    %c2_53 = arith.constant 2 : index
    %c0_54 = arith.constant 0 : index
    %c0_55 = arith.constant 0 : index
    %87 = vector.load %arg5[%c2_53, %c0_54, %c0_55] : memref<4x8x128xf32, #tpu.memory_space<vmem>>, vector<1x2x128xf32>
    %88 = vector.shape_cast %87 : vector<1x2x128xf32> to vector<2x128xf32>
    %89 = arith.addf %88, %86 : vector<2x128xf32>
    %c2_56 = arith.constant 2 : index
    %c0_57 = arith.constant 0 : index
    %c0_58 = arith.constant 0 : index
    %90 = vector.load %arg5[%c2_56, %c0_57, %c0_58] : memref<4x8x128xf32, #tpu.memory_space<vmem>>, vector<1x2x128xf32>
    %91 = vector.shape_cast %90 : vector<1x2x128xf32> to vector<2x128xf32>
    %92 = vector.shape_cast %89 : vector<2x128xf32> to vector<1x2x128xf32>
    tpu.vector_store %arg5[%c2_56, %c0_57, %c0_58], %92 {strides = array<i32>} : memref<4x8x128xf32, #tpu.memory_space<vmem>>, vector<1x2x128xf32>,
    %c2_59 = arith.constant 2 : index
    %c0_60 = arith.constant 0 : index
    %c0_61 = arith.constant 0 : index
    %93 = vector.load %arg6[%c2_59, %c0_60, %c0_61] : memref<4x8x128xf32, #tpu.memory_space<vmem>>, vector<1x2x128xf32>
    %94 = vector.shape_cast %93 : vector<1x2x128xf32> to vector<2x128xf32>
    %95 = arith.addf %94, %81 : vector<2x128xf32>
    %c2_62 = arith.constant 2 : index
    %c0_63 = arith.constant 0 : index
    %c0_64 = arith.constant 0 : index
    %96 = vector.load %arg6[%c2_62, %c0_63, %c0_64] : memref<4x8x128xf32, #tpu.memory_space<vmem>>, vector<1x2x128xf32>
    %97 = vector.shape_cast %96 : vector<1x2x128xf32> to vector<2x128xf32>
    %98 = vector.shape_cast %95 : vector<2x128xf32> to vector<1x2x128xf32>
    tpu.vector_store %arg6[%c2_62, %c0_63, %c0_64], %98 {strides = array<i32>} : memref<4x8x128xf32, #tpu.memory_space<vmem>>, vector<1x2x128xf32>,
    %c2_65 = arith.constant 2 : index
    %c0_66 = arith.constant 0 : index
    %c0_67 = arith.constant 0 : index
    %99 = vector.load %arg7[%c2_65, %c0_66, %c0_67] : memref<4x8x128xf32, #tpu.memory_space<vmem>>, vector<1x2x128xf32>
    %100 = vector.shape_cast %99 : vector<1x2x128xf32> to vector<2x128xf32>
    %101 = arith.addf %100, %85 : vector<2x128xf32>
    %c2_68 = arith.constant 2 : index
    %c0_69 = arith.constant 0 : index
    %c0_70 = arith.constant 0 : index
    %102 = vector.load %arg7[%c2_68, %c0_69, %c0_70] : memref<4x8x128xf32, #tpu.memory_space<vmem>>, vector<1x2x128xf32>
    %103 = vector.shape_cast %102 : vector<1x2x128xf32> to vector<2x128xf32>
    %104 = vector.shape_cast %101 : vector<2x128xf32> to vector<1x2x128xf32>
    tpu.vector_store %arg7[%c2_68, %c0_69, %c0_70], %104 {strides = array<i32>} : memref<4x8x128xf32, #tpu.memory_space<vmem>>, vector<1x2x128xf32>,
    %105 = arith.mulf %24, %32 : vector<2x128xf32>
    %c3_i32 = arith.constant 3 : i32
    %106 = vector.broadcast %c3_i32 : i32 to vector<2x128xi32>
    %107 = arith.cmpi eq, %13, %106 : vector<2x128xi32>
    %108 = arith.extui %107 : vector<2x128xi1> to vector<2x128xi32>
    %109 = arith.sitofp %108 : vector<2x128xi32> to vector<2x128xf32>
    %110 = arith.mulf %105, %109 : vector<2x128xf32>
    %c3_71 = arith.constant 3 : index
    %c0_72 = arith.constant 0 : index
    %c0_73 = arith.constant 0 : index
    %111 = vector.load %arg5[%c3_71, %c0_72, %c0_73] : memref<4x8x128xf32, #tpu.memory_space<vmem>>, vector<1x2x128xf32>
    %112 = vector.shape_cast %111 : vector<1x2x128xf32> to vector<2x128xf32>
    %113 = arith.addf %112, %110 : vector<2x128xf32>
    %c3_74 = arith.constant 3 : index
    %c0_75 = arith.constant 0 : index
    %c0_76 = arith.constant 0 : index
    %114 = vector.load %arg5[%c3_74, %c0_75, %c0_76] : memref<4x8x128xf32, #tpu.memory_space<vmem>>, vector<1x2x128xf32>
    %115 = vector.shape_cast %114 : vector<1x2x128xf32> to vector<2x128xf32>
    %116 = vector.shape_cast %113 : vector<2x128xf32> to vector<1x2x128xf32>
    tpu.vector_store %arg5[%c3_74, %c0_75, %c0_76], %116 {strides = array<i32>} : memref<4x8x128xf32, #tpu.memory_space<vmem>>, vector<1x2x128xf32>,
    %c3_77 = arith.constant 3 : index
    %c0_78 = arith.constant 0 : index
    %c0_79 = arith.constant 0 : index
    %117 = vector.load %arg6[%c3_77, %c0_78, %c0_79] : memref<4x8x128xf32, #tpu.memory_space<vmem>>, vector<1x2x128xf32>
    %118 = vector.shape_cast %117 : vector<1x2x128xf32> to vector<2x128xf32>
    %119 = arith.addf %118, %105 : vector<2x128xf32>
    %c3_80 = arith.constant 3 : index
    %c0_81 = arith.constant 0 : index
    %c0_82 = arith.constant 0 : index
    %120 = vector.load %arg6[%c3_80, %c0_81, %c0_82] : memref<4x8x128xf32, #tpu.memory_space<vmem>>, vector<1x2x128xf32>
    %121 = vector.shape_cast %120 : vector<1x2x128xf32> to vector<2x128xf32>
    %122 = vector.shape_cast %119 : vector<2x128xf32> to vector<1x2x128xf32>
    tpu.vector_store %arg6[%c3_80, %c0_81, %c0_82], %122 {strides = array<i32>} : memref<4x8x128xf32, #tpu.memory_space<vmem>>, vector<1x2x128xf32>,
    %c3_83 = arith.constant 3 : index
    %c0_84 = arith.constant 0 : index
    %c0_85 = arith.constant 0 : index
    %123 = vector.load %arg7[%c3_83, %c0_84, %c0_85] : memref<4x8x128xf32, #tpu.memory_space<vmem>>, vector<1x2x128xf32>
    %124 = vector.shape_cast %123 : vector<1x2x128xf32> to vector<2x128xf32>
    %125 = arith.addf %124, %109 : vector<2x128xf32>
    %c3_86 = arith.constant 3 : index
    %c0_87 = arith.constant 0 : index
    %c0_88 = arith.constant 0 : index
    %126 = vector.load %arg7[%c3_86, %c0_87, %c0_88] : memref<4x8x128xf32, #tpu.memory_space<vmem>>, vector<1x2x128xf32>
    %127 = vector.shape_cast %126 : vector<1x2x128xf32> to vector<2x128xf32>
    %128 = vector.shape_cast %125 : vector<2x128xf32> to vector<1x2x128xf32>
    tpu.vector_store %arg7[%c3_86, %c0_87, %c0_88], %128 {strides = array<i32>} : memref<4x8x128xf32, #tpu.memory_space<vmem>>, vector<1x2x128xf32>,
    %c0_i32_89 = arith.constant 0 : i32
    %129 = arith.cmpi eq, %arg1, %c0_i32_89 : i32
    %130 = arith.extui %129 : i1 to i32
    %c0_i32_90 = arith.constant 0 : i32
    %131 = arith.cmpi ne, %130, %c0_i32_90 : i32
    scf.if %131 {
      %c0_91 = arith.constant 0 : index
      %c0_92 = arith.constant 0 : index
      %c0_93 = arith.constant 0 : index
      %132 = vector.load %arg5[%c0_91, %c0_92, %c0_93] : memref<4x8x128xf32, #tpu.memory_space<vmem>>, vector<4x8x128xf32>
      %cst_94 = arith.constant dense<0.000000e+00> : vector<4x128xf32>
      %133 = vector.multi_reduction <add>, %132, %cst_94 [1] : vector<4x8x128xf32> to vector<4x128xf32>
      %cst_95 = arith.constant dense<0.000000e+00> : vector<4xf32>
      %134 = vector.multi_reduction <add>, %133, %cst_95 [1] : vector<4x128xf32> to vector<4xf32>
      %c0_96 = arith.constant 0 : index
      %c0_97 = arith.constant 0 : index
      %c0_98 = arith.constant 0 : index
      %135 = vector.load %arg6[%c0_96, %c0_97, %c0_98] : memref<4x8x128xf32, #tpu.memory_space<vmem>>, vector<4x8x128xf32>
      %cst_99 = arith.constant dense<0.000000e+00> : vector<4x128xf32>
      %136 = vector.multi_reduction <add>, %135, %cst_99 [1] : vector<4x8x128xf32> to vector<4x128xf32>
      %cst_100 = arith.constant dense<0.000000e+00> : vector<4xf32>
      %137 = vector.multi_reduction <add>, %136, %cst_100 [1] : vector<4x128xf32> to vector<4xf32>
      %c0_101 = arith.constant 0 : index
      %c0_102 = arith.constant 0 : index
      %c0_103 = arith.constant 0 : index
      %138 = vector.load %arg7[%c0_101, %c0_102, %c0_103] : memref<4x8x128xf32, #tpu.memory_space<vmem>>, vector<4x8x128xf32>
      %cst_104 = arith.constant dense<0.000000e+00> : vector<4x128xf32>
      %139 = vector.multi_reduction <add>, %138, %cst_104 [1] : vector<4x8x128xf32> to vector<4x128xf32>
      %cst_105 = arith.constant dense<0.000000e+00> : vector<4xf32>
      %140 = vector.multi_reduction <add>, %139, %cst_105 [1] : vector<4x128xf32> to vector<4xf32>
      %141 = vector.shape_cast %134 : vector<4xf32> to vector<1x4xf32>
      %c0_106 = arith.constant 0 : index
      %c0_107 = arith.constant 0 : index
      %c0_108 = arith.constant 0 : index
      %142 = vector.load %arg4[%c0_106, %c0_107, %c0_108] : memref<1x3x4xf32, #tpu.memory_space<vmem>>, vector<1x1x4xf32>
      %143 = vector.shape_cast %142 : vector<1x1x4xf32> to vector<1x4xf32>
      %144 = vector.shape_cast %141 : vector<1x4xf32> to vector<1x1x4xf32>
      tpu.vector_store %arg4[%c0_106, %c0_107, %c0_108], %144 {strides = array<i32>} : memref<1x3x4xf32, #tpu.memory_space<vmem>>, vector<1x1x4xf32>,
      %145 = vector.shape_cast %137 : vector<4xf32> to vector<1x4xf32>
      %c0_109 = arith.constant 0 : index
      %c1_110 = arith.constant 1 : index
      %c0_111 = arith.constant 0 : index
      %146 = vector.load %arg4[%c0_109, %c1_110, %c0_111] : memref<1x3x4xf32, #tpu.memory_space<vmem>>, vector<1x1x4xf32>
      %147 = vector.shape_cast %146 : vector<1x1x4xf32> to vector<1x4xf32>
      %148 = vector.shape_cast %145 : vector<1x4xf32> to vector<1x1x4xf32>
      tpu.vector_store %arg4[%c0_109, %c1_110, %c0_111], %148 {strides = array<i32>} : memref<1x3x4xf32, #tpu.memory_space<vmem>>, vector<1x1x4xf32>,
      %149 = vector.shape_cast %140 : vector<4xf32> to vector<1x4xf32>
      %c0_112 = arith.constant 0 : index
      %c2_113 = arith.constant 2 : index
      %c0_114 = arith.constant 0 : index
      %150 = vector.load %arg4[%c0_112, %c2_113, %c0_114] : memref<1x3x4xf32, #tpu.memory_space<vmem>>, vector<1x1x4xf32>
      %151 = vector.shape_cast %150 : vector<1x1x4xf32> to vector<1x4xf32>
      %152 = vector.shape_cast %149 : vector<1x4xf32> to vector<1x1x4xf32>
      tpu.vector_store %arg4[%c0_112, %c2_113, %c0_114], %152 {strides = array<i32>} : memref<1x3x4xf32, #tpu.memory_space<vmem>>, vector<1x1x4xf32>,
    } else {
    }
    return
  }
  func.func @transform_0(%arg0: i32, %arg1: i32) -> (i32, i32, i32, i32) {
    %c0_i32 = arith.constant 0 : i32
    %c0_i32_0 = arith.constant 0 : i32
    %c0_i32_1 = arith.constant 0 : i32
    return %arg0, %c0_i32, %arg1, %c0_i32_0 : i32, i32, i32, i32
  }
  func.func @transform_1(%arg0: i32, %arg1: i32) -> (i32, i32, i32) {
    %c0_i32 = arith.constant 0 : i32
    %c0_i32_0 = arith.constant 0 : i32
    return %arg0, %arg1, %c0_i32 : i32, i32, i32
  }
  func.func @transform_2(%arg0: i32, %arg1: i32) -> (i32, i32, i32) {
    %c0_i32 = arith.constant 0 : i32
    %c0_i32_0 = arith.constant 0 : i32
    %c0_i32_1 = arith.constant 0 : i32
    return %arg0, %c0_i32, %c0_i32_0 : i32, i32, i32
  }
}

</mosaic_0001>

<llo_original>
// kernel: tpu_custom_call.1
$region0: #{tpu_custom_call.1}
  #allocation0 [shape = 'u32[]', space=smem, size = 0x4, offset = 0x4, fixed_abs, tag = 'smem constant byte address 0x4 - core index']
  #allocation1 [shape = 'u32[144,128]{1,0:T(1,128)}', space=vmem, size = 0x12000, scoped, tag = 'internal scratch']
  #allocation2 [shape = 'f32[4,8,128]{2,1,0:T(8,128)}', space=vmem, size = 0x4000, scoped, tag = 'scratch operand']
  #allocation3 [shape = 'f32[4,8,128]{2,1,0:T(8,128)}', space=vmem, size = 0x4000, scoped, tag = 'scratch operand']
  #allocation4 [shape = 'f32[4,8,128]{2,1,0:T(8,128)}', space=vmem, size = 0x4000, scoped, tag = 'scratch operand']
  %s0 = inlined_call_operand.hbm [shape: f32[2,4,2,128], index: 0, kind: input, shape index: {}]
  %s1 = inlined_call_operand.vmem [shape: s8[2,2,128], index: 1, kind: input, shape index: {}]
  %s2 = inlined_call_operand.vmem [shape: f32[2,3,4], index: 2, kind: output, shape index: {}]
  %s3 = sld [smem:[#allocation0]]
  $region53: #{tpu_custom_call.1} parent=0
    _
  %s5 = ssub.s32 1, %s3
  %s6 = scalar_select 0, %s5, %s3
  $region1: #{tpu_custom_call.1} parent=0
    #allocation5 [shape = 'u8[8192]{0}', space=vmem, size = 0x2000, scoped, tag = 'input window, operand 0']
    #allocation6 [shape = 's32[2]{0}', space=sflag, size = 0x8, scoped, tag = 'scoped memory for tpu_custom_call.1']
    %7 = vsyncpa [#allocation6], 0
    %s8 = scalar_lea.sflag [#allocation6], 1
    %9 = vsyncpa %s8, 0
    loop: start=0, step=1, limit=4
    $region2: #{tpu_custom_call.1} parent=1 // loop_pre_header
      _
    $region3: #{tpu_custom_call.1} parent=1 // loop_header
      %s11 = sphi 0, %s15
      %p12 = scmp.ge.s32.totalorder %s11, 4
      %s18 = sphi 0, %s30
      %s19 = sphi 0, %s26
      %s20 = sphi 0, %s18
      %s21 = sphi 0, %s19
      %s22 = sphi 0, %s20
      %s23 = sphi 0, %s21
      %s35 = sphi 0, %s37
      %s38 = sphi 0, %s35
      %s39 = sphi 0, %s38
      %s55 = sphi 0, %s39
      %s63 = sphi 0, %s65
      %s66 = sphi 0, %s63
      %s67 = sphi 0, %s66
      %s83 = sphi 0, %s67
      %s89 = sphi 0, %s91
      %s92 = sphi 0, %s89
      %s93 = sphi 0, %s92
      %s109 = sphi 0, %s93
    $region4: #{tpu_custom_call.1} parent=1 // loop_header_branch
      %14 = sbr.rel (%p12) target = $region8
    $region5: #{tpu_custom_call.1} parent=1 // loop_body
      %s16 = ssub.s32 %s11, 1
      %s17 = ssub.s32 %s11, 2
      %s24 = sadd.s32 1, %s19
      %p25 = scmp.ge.s32.totalorder %s24, 1
      %s26 = scalar_select %p25, 0, %s24
      %s27 = sadd.s32 1, %s18
      %s28 = scalar_select %p25, %s27, %s18
      %p29 = scmp.ge.s32.totalorder %s28, 2
      %s30 = scalar_select %p29, 0, %s28
      %s31 = ssub.s32 %s18, %s30
      %s32 = ssub.s32 %s19, %s26
      %s33 = sor.u32 %s31, %s32
      %p34 = scmp.eq.s32.totalorder %s33, 0
      %s36 = sadd.s32 %s35, 1
      %s37 = scalar_select %p34, %s35, %s36
      %p40 = pneg %p34
      %p41 = scmp.eq.s32.totalorder %s11, 1
      %p42 = por %p40, %p41
      %p43 = scmp.ne.s32.totalorder %s35, %s38
      %p44 = scmp.eq.s32.totalorder %s11, 0
      %p45 = por %p43, %p44
      %p46 = scmp.ne.s32.totalorder %s35, %s38
      %p47 = scmp.eq.s32.totalorder %s16, 1
      %p48 = por %p46, %p47
      %p49 = scmp.ne.s32.totalorder %s38, %s39
      %p50 = scmp.eq.s32.totalorder %s16, 0
      %p51 = por %p49, %p50
      %p52 = scmp.ne.s32.totalorder %s38, %s39
      %p53 = scmp.eq.s32.totalorder %s17, 1
      %p54 = por %p52, %p53
      %p56 = scmp.ne.s32.totalorder %s39, %s55
      %p57 = scmp.eq.s32.totalorder %s17, 0
      %p58 = por %p56, %p57
      %s59 = ssub.s32 %s18, %s30
      %s60 = ssub.s32 %s19, %s26
      %s61 = sor.u32 %s59, %s60
      %p62 = scmp.eq.s32.totalorder %s61, 0
      %s64 = sadd.s32 %s63, 1
      %s65 = scalar_select %p62, %s63, %s64
      %p68 = pneg %p62
      %p69 = scmp.eq.s32.totalorder %s11, 1
      %p70 = por %p68, %p69
      %p71 = scmp.ne.s32.totalorder %s63, %s66
      %p72 = scmp.eq.s32.totalorder %s11, 0
      %p73 = por %p71, %p72
      %p74 = scmp.ne.s32.totalorder %s63, %s66
      %p75 = scmp.eq.s32.totalorder %s16, 1
      %p76 = por %p74, %p75
      %p77 = scmp.ne.s32.totalorder %s66, %s67
      %p78 = scmp.eq.s32.totalorder %s16, 0
      %p79 = por %p77, %p78
      %p80 = scmp.ne.s32.totalorder %s66, %s67
      %p81 = scmp.eq.s32.totalorder %s17, 1
      %p82 = por %p80, %p81
      %p84 = scmp.ne.s32.totalorder %s67, %s83
      %p85 = scmp.eq.s32.totalorder %s17, 0
      %p86 = por %p84, %p85
      %s87 = ssub.s32 %s18, %s30
      %p88 = scmp.eq.s32.totalorder %s87, 0
      %s90 = sadd.s32 %s89, 1
      %s91 = scalar_select %p88, %s89, %s90
      %p94 = pneg %p88
      %p95 = scmp.eq.s32.totalorder %s11, 1
      %p96 = por %p94, %p95
      %p97 = scmp.ne.s32.totalorder %s89, %s92
      %p98 = scmp.eq.s32.totalorder %s11, 0
      %p99 = por %p97, %p98
      %p100 = scmp.ne.s32.totalorder %s89, %s92
      %p101 = scmp.eq.s32.totalorder %s16, 1
      %p102 = por %p100, %p101
      %p103 = scmp.ne.s32.totalorder %s92, %s93
      %p104 = scmp.eq.s32.totalorder %s16, 0
      %p105 = por %p103, %p104
      %p106 = scmp.ne.s32.totalorder %s92, %s93
      %p107 = scmp.eq.s32.totalorder %s17, 1
      %p108 = por %p106, %p107
      %p110 = scmp.ne.s32.totalorder %s93, %s109
      %p111 = scmp.eq.s32.totalorder %s17, 0
      %p112 = por %p110, %p111
      %p113 = scmp.le.s32.totalorder 1, %s11
      %p114 = scmp.lt.s32.totalorder %s11, 3
      %p115 = pnand %p113, %p114
      %p116 = pneg %p115
      // Predicated region
      $region9: #{tpu_custom_call.1} parent=5 // pred_check
        _
      $region10: #{tpu_custom_call.1} parent=5 // pred_check_branch
        %118 = sbr.rel (%p115) target = $region12
      $region11: #{tpu_custom_call.1} parent=5 // pred_region
        %s119 = ssub.s32 %s11, 1
      $region12: #{tpu_custom_call.1} parent=5 // pred_fallthru
        _
      %p120 = scmp.lt.s32.totalorder %s11, 2
      // Predicated region
      $region13: #{tpu_custom_call.1} parent=5 // pred_check
        %p121 = pneg %p120
      $region14: #{tpu_custom_call.1} parent=5 // pred_check_branch
        %123 = sbr.rel (%p121) target = $region16
      $region15: #{tpu_custom_call.1} parent=5 // pred_region
        // Predicated region
        $region17: #{tpu_custom_call.1} parent=15 // pred_check
          %p124 = pneg %p45
        $region18: #{tpu_custom_call.1} parent=15 // pred_check_branch
          %126 = sbr.rel (%p124) target = $region20
        $region19: #{tpu_custom_call.1} parent=15 // pred_region
          %s127 = sand.u32 %s35, 1
          %s128 = scalar_lea.sflag [#allocation6], %s127
          %s129 = sand.u32 %s35, 1
          %s130 = smul.addr %s129, 8
          %s131 = scalar_lea.vmem [#allocation5], %s130
          %s133 = ssub.s32 128, 128
          %134 = vsyncadd %s128, %s133
          %s135 = smul.addr %s18, 4
          %s136 = sadd.s32 %s19, %s135
          %s137 = smul.addr %s136, 32
          %s138 = scalar_lea.hbm %s0, %s137
          %s139 = sshll.u32 %s131, 4
          %s140 = int_to_ptr.vmem [resolvable:$true] %s139
          %145 = dma.hbm_to_vmem [thread:$0]  %s138, 128, %s140, %s128, 32, 32, 2
        $region20: #{tpu_custom_call.1} parent=15 // pred_fallthru
          _
        // Predicated region
        $region21: #{tpu_custom_call.1} parent=15 // pred_check
          %p146 = pneg %p73
        $region22: #{tpu_custom_call.1} parent=15 // pred_check_branch
          %148 = sbr.rel (%p146) target = $region24
        $region23: #{tpu_custom_call.1} parent=15 // pred_region
          %p149 = scmp.lt.s32.totalorder %s18, 1
          %s150 = scalar_select %p149, %s18, 1
          %p151 = scmp.lt.s32.totalorder %s19, 0
          %s152 = scalar_select %p151, %s19, 0
          %s153 = sadd.s32 %s152, %s150
          %s154 = scalar_lea.vmem %s1, %s153
        $region24: #{tpu_custom_call.1} parent=15 // pred_fallthru
          _
      $region16: #{tpu_custom_call.1} parent=5 // pred_fallthru
        _
      %p155 = scmp.le.s32.totalorder 1, %s11
      %p156 = scmp.lt.s32.totalorder %s11, 3
      %p157 = pnand %p155, %p156
      %p158 = pneg %p157
      // Predicated region
      $region25: #{tpu_custom_call.1} parent=5 // pred_check
        _
      $region26: #{tpu_custom_call.1} parent=5 // pred_check_branch
        %160 = sbr.rel (%p157) target = $region28
      $region27: #{tpu_custom_call.1} parent=5 // pred_region
        %s161 = ssub.s32 %s11, 1
        %s162 = sand.u32 %s38, 1
        %s163 = scalar_lea.sflag [#allocation6], %s162
        %s164 = sand.u32 %s38, 1
        %s165 = smul.addr %s164, 8
        %s166 = scalar_lea.vmem [#allocation5], %s165
        // Predicated region
        $region29: #{tpu_custom_call.1} parent=27 // pred_check
          %p167 = pneg %p51
        $region30: #{tpu_custom_call.1} parent=27 // pred_check_branch
          %169 = sbr.rel (%p167) target = $region32
        $region31: #{tpu_custom_call.1} parent=27 // pred_region
          %170 = dma.done %s163, 128
        $region32: #{tpu_custom_call.1} parent=27 // pred_fallthru
          _
        %s171 = sand.u32 %s38, 1
        %s172 = scalar_lea.sflag [#allocation6], %s171
        %s173 = sand.u32 %s38, 1
        %s174 = smul.addr %s173, 8
        %s175 = scalar_lea.vmem [#allocation5], %s174
        %p176 = pneg %p51
        %p177 = pneg %p48
        %p178 = scmp.lt.s32.totalorder %s20, 1
        %s179 = scalar_select %p178, %s20, 1
        %p180 = scmp.lt.s32.totalorder %s21, 0
        %s181 = scalar_select %p180, %s21, 0
        %s182 = sadd.s32 %s181, %s179
        %s183 = scalar_lea.vmem %s1, %s182
        %p184 = pneg %p79
        %p185 = pneg %p76
        %p186 = pneg %p105
        %p187 = pneg %p102
        %p188 = scmp.lt.s32.totalorder %s20, 1
        %s189 = scalar_select %p188, %s20, 1
        %s190 = smul.addr %s189, 4
        %s191 = scalar_lea.vmem %s2, %s190
        %p192 = scmp.lt.s32.totalorder %s20, 1
        %s193 = scalar_select %p192, %s20, 1
        %p194 = scmp.lt.s32.totalorder %s21, 0
        %s195 = scalar_select %p194, %s21, 0
        %s196 = sadd.s32 %s195, %s193
        %s197 = scalar_lea.vmem %s1, %s196
        %p198 = scmp.lt.s32.totalorder %s20, 1
        %s199 = scalar_select %p198, %s20, 1
        %s200 = smul.addr %s199, 4
        %s201 = scalar_lea.vmem %s2, %s200
        %p202 = scmp.eq.s32.totalorder %s21, 0
        // Predicated region
        $region33: #{tpu_custom_call.1} parent=27 // pred_check
          %p203 = pneg %p202
        $region34: #{tpu_custom_call.1} parent=27 // pred_check_branch
          %205 = sbr.rel (%p203) target = $region36
        $region35: #{tpu_custom_call.1} parent=27 // pred_region
          %206 = vst [vmem:[#allocation2] sm:$0xff] 0.0
          %207 = vst [vmem:[#allocation2 + $0x8] sm:$0xff] 0.0
          %208 = vst [vmem:[#allocation2 + $0x10] sm:$0xff] 0.0
          %209 = vst [vmem:[#allocation2 + $0x18] sm:$0xff] 0.0
          %210 = vst [vmem:[#allocation3] sm:$0xff] 0.0
          %211 = vst [vmem:[#allocation3 + $0x8] sm:$0xff] 0.0
          %212 = vst [vmem:[#allocation3 + $0x10] sm:$0xff] 0.0
          %213 = vst [vmem:[#allocation3 + $0x18] sm:$0xff] 0.0
          %214 = vst [vmem:[#allocation4] sm:$0xff] 0.0
          %215 = vst [vmem:[#allocation4 + $0x8] sm:$0xff] 0.0
          %216 = vst [vmem:[#allocation4 + $0x10] sm:$0xff] 0.0
          %217 = vst [vmem:[#allocation4 + $0x18] sm:$0xff] 0.0
        $region36: #{tpu_custom_call.1} parent=27 // pred_fallthru
          _
        %v218 = vld [vmem:[%s166] sm:$0x3]
        %s219 = scalar_lea.vmem %s166, 2 [#allocation5]
        %v220 = vld [vmem:[%s219] sm:$0x3]
        %s221 = scalar_lea.vmem %s166, 4 [#allocation5]
        %v222 = vld [vmem:[%s221] sm:$0x3]
        %s223 = scalar_lea.vmem %s166, 6 [#allocation5]
        %v224 = vld [vmem:[%s223] sm:$0x3]
        %v225 = vld [vmem:[%s197] sm:$0x1]
        %v226 = vunpack.c.0.s8 %v225
        %v227 = vmax.f32 %v218, %v220
        %v228 = vmax.f32 %v227, %v222
        %v229 = vmax.f32 %v228, %v224
        %v230 = vsub.f32 %v218, %v229
        %v231 = vmul.f32 %v230, 1.442695
        %v232 = vpow.pop %v231
        %v233 = vsub.f32 %v220, %v229
        %v234 = vmul.f32 %v233, 1.442695
        %v235 = vpow.pop %v234
        %v236 = vsub.f32 %v222, %v229
        %v237 = vmul.f32 %v236, 1.442695
        %v238 = vpow.pop %v237
        %v239 = vsub.f32 %v224, %v229
        %v240 = vmul.f32 %v239, 1.442695
        %v241 = vpow.pop %v240
        %v242 = vadd.f32 %v232, %v235
        %v243 = vadd.f32 %v242, %v238
        %v244 = vadd.f32 %v243, %v241
        %v245 = vrcp.pop %v244
        %v246 = vmul.f32 %v244, %v245
        %v247 = vsub.f32 2.0, %v246
        %v248 = vmul.f32 %v245, %v247
        %v249 = vmul.f32 %v232, %v248
        %vm250 = vcmp.eq.s32.totalorder %v226, 0
        %v251 = vsel %vm250, 1, 0
        %v252 = vcvt.s32.f32 %v251
        %v253 = vmul.f32 %v249, %v252
        %v254 = vld [vmem:[#allocation2] sm:$0x3]
        %v255 = vadd.f32 %v254, %v253
        %256 = vst [vmem:[#allocation2] sm:$0x3] %v255
        %v257 = vld [vmem:[#allocation3] sm:$0x3]
        %v258 = vadd.f32 %v257, %v249
        %259 = vst [vmem:[#allocation3] sm:$0x3] %v258
        %v260 = vld [vmem:[#allocation4] sm:$0x3]
        %v261 = vadd.f32 %v260, %v252
        %262 = vst [vmem:[#allocation4] sm:$0x3] %v261
        %v263 = vmul.f32 %v235, %v248
        %vm264 = vcmp.eq.s32.totalorder %v226, 1
        %v265 = vsel %vm264, 1, 0
        %v266 = vcvt.s32.f32 %v265
        %v267 = vmul.f32 %v263, %v266
        %s268 = scalar_lea.vmem [#allocation2], 8
        %v269 = vld [vmem:[%s268] sm:$0x3]
        %v270 = vadd.f32 %v269, %v267
        %271 = vst [vmem:[%s268] sm:$0x3] %v270
        %s272 = scalar_lea.vmem [#allocation3], 8
        %v273 = vld [vmem:[%s272] sm:$0x3]
        %v274 = vadd.f32 %v273, %v263
        %275 = vst [vmem:[%s272] sm:$0x3] %v274
        %s276 = scalar_lea.vmem [#allocation4], 8
        %v277 = vld [vmem:[%s276] sm:$0x3]
        %v278 = vadd.f32 %v277, %v266
        %279 = vst [vmem:[%s276] sm:$0x3] %v278
        %v280 = vmul.f32 %v238, %v248
        %vm281 = vcmp.eq.s32.totalorder %v226, 2
        %v282 = vsel %vm281, 1, 0
        %v283 = vcvt.s32.f32 %v282
        %v284 = vmul.f32 %v280, %v283
        %s285 = scalar_lea.vmem [#allocation2], 16
        %v286 = vld [vmem:[%s285] sm:$0x3]
        %v287 = vadd.f32 %v286, %v284
        %288 = vst [vmem:[%s285] sm:$0x3] %v287
        %s289 = scalar_lea.vmem [#allocation3], 16
        %v290 = vld [vmem:[%s289] sm:$0x3]
        %v291 = vadd.f32 %v290, %v280
        %292 = vst [vmem:[%s289] sm:$0x3] %v291
        %s293 = scalar_lea.vmem [#allocation4], 16
        %v294 = vld [vmem:[%s293] sm:$0x3]
        %v295 = vadd.f32 %v294, %v283
        %296 = vst [vmem:[%s293] sm:$0x3] %v295
        %v297 = vmul.f32 %v241, %v248
        %vm298 = vcmp.eq.s32.totalorder %v226, 3
        %v299 = vsel %vm298, 1, 0
        %v300 = vcvt.s32.f32 %v299
        %v301 = vmul.f32 %v297, %v300
        %s302 = scalar_lea.vmem [#allocation2], 24
        %v303 = vld [vmem:[%s302] sm:$0x3]
        %v304 = vadd.f32 %v303, %v301
        %305 = vst [vmem:[%s302] sm:$0x3] %v304
        %s306 = scalar_lea.vmem [#allocation3], 24
        %v307 = vld [vmem:[%s306] sm:$0x3]
        %v308 = vadd.f32 %v307, %v297
        %309 = vst [vmem:[%s306] sm:$0x3] %v308
        %s310 = scalar_lea.vmem [#allocation4], 24
        %v311 = vld [vmem:[%s310] sm:$0x3]
        %v312 = vadd.f32 %v311, %v300
        %313 = vst [vmem:[%s310] sm:$0x3] %v312
        // Predicated region
        $region37: #{tpu_custom_call.1} parent=27 // pred_check
          %p314 = pneg %p202
        $region38: #{tpu_custom_call.1} parent=27 // pred_check_branch
          %316 = sbr.rel (%p314) target = $region40
        $region39: #{tpu_custom_call.1} parent=27 // pred_region
          %v317 = vld [vmem:[#allocation2] sm:$0xff]
          %v318 = vld [vmem:[#allocation2 + $0x8] sm:$0xff]
          %v319 = vld [vmem:[#allocation2 + $0x10] sm:$0xff]
          %v320 = vld [vmem:[#allocation2 + $0x18] sm:$0xff]
          %v321 = vrot.slane %v317, 4
          %v322 = vadd.f32 %v317, %v321
          %v323 = vrot.slane %v322, 2
          %v324 = vadd.f32 %v322, %v323
          %v325 = vrot.slane %v324, 1
          %v326 = vadd.f32 %v324, %v325
          %v327 = vrot.slane %v318, 4
          %v328 = vadd.f32 %v318, %v327
          %v329 = vrot.slane %v328, 2
          %v330 = vadd.f32 %v328, %v329
          %v331 = vrot.slane %v330, 1
          %v332 = vadd.f32 %v330, %v331
          %v333 = vrot.slane %v319, 4
          %v334 = vadd.f32 %v319, %v333
          %v335 = vrot.slane %v334, 2
          %v336 = vadd.f32 %v334, %v335
          %v337 = vrot.slane %v336, 1
          %v338 = vadd.f32 %v336, %v337
          %v339 = vrot.slane %v320, 4
          %v340 = vadd.f32 %v320, %v339
          %v341 = vrot.slane %v340, 2
          %v342 = vadd.f32 %v340, %v341
          %v343 = vrot.slane %v342, 1
          %v344 = vadd.f32 %v342, %v343
          %vm349 = vcmask 1041409
          %v350 = vsel %vm349, %v332, %v326
          %vm351 = vcmask 1042434
          %v352 = vsel %vm351, %v338, %v350
          %vm353 = vcmask 1043459
          %v354 = vsel %vm353, %v344, %v352
          %vm356 = vcmask 1043456
          %v357 = vsel %vm356, %v354, 0.0
          %358 = vadd.xlane.f32.xlu0 %v357
          %v359 = vpop.xlane.xlu0 %358
          %v360 = vld [vmem:[#allocation3] sm:$0xff]
          %v361 = vld [vmem:[#allocation3 + $0x8] sm:$0xff]
          %v362 = vld [vmem:[#allocation3 + $0x10] sm:$0xff]
          %v363 = vld [vmem:[#allocation3 + $0x18] sm:$0xff]
          %v364 = vrot.slane %v360, 4
          %v365 = vadd.f32 %v360, %v364
          %v366 = vrot.slane %v365, 2
          %v367 = vadd.f32 %v365, %v366
          %v368 = vrot.slane %v367, 1
          %v369 = vadd.f32 %v367, %v368
          %v370 = vrot.slane %v361, 4
          %v371 = vadd.f32 %v361, %v370
          %v372 = vrot.slane %v371, 2
          %v373 = vadd.f32 %v371, %v372
          %v374 = vrot.slane %v373, 1
          %v375 = vadd.f32 %v373, %v374
          %v376 = vrot.slane %v362, 4
          %v377 = vadd.f32 %v362, %v376
          %v378 = vrot.slane %v377, 2
          %v379 = vadd.f32 %v377, %v378
          %v380 = vrot.slane %v379, 1
          %v381 = vadd.f32 %v379, %v380
          %v382 = vrot.slane %v363, 4
          %v383 = vadd.f32 %v363, %v382
          %v384 = vrot.slane %v383, 2
          %v385 = vadd.f32 %v383, %v384
          %v386 = vrot.slane %v385, 1
          %v387 = vadd.f32 %v385, %v386
          %v392 = vsel %vm349, %v375, %v369
          %v393 = vsel %vm351, %v381, %v392
          %v394 = vsel %vm353, %v387, %v393
          %v396 = vsel %vm356, %v394, 0.0
          %397 = vadd.xlane.f32.xlu0 %v396
          %v398 = vpop.xlane.xlu0 %397
          %v399 = vld [vmem:[#allocation4] sm:$0xff]
          %v400 = vld [vmem:[#allocation4 + $0x8] sm:$0xff]
          %v401 = vld [vmem:[#allocation4 + $0x10] sm:$0xff]
          %v402 = vld [vmem:[#allocation4 + $0x18] sm:$0xff]
          %v403 = vrot.slane %v399, 4
          %v404 = vadd.f32 %v399, %v403
          %v405 = vrot.slane %v404, 2
          %v406 = vadd.f32 %v404, %v405
          %v407 = vrot.slane %v406, 1
          %v408 = vadd.f32 %v406, %v407
          %v409 = vrot.slane %v400, 4
          %v410 = vadd.f32 %v400, %v409
          %v411 = vrot.slane %v410, 2
          %v412 = vadd.f32 %v410, %v411
          %v413 = vrot.slane %v412, 1
          %v414 = vadd.f32 %v412, %v413
          %v415 = vrot.slane %v401, 4
          %v416 = vadd.f32 %v401, %v415
          %v417 = vrot.slane %v416, 2
          %v418 = vadd.f32 %v416, %v417
          %v419 = vrot.slane %v418, 1
          %v420 = vadd.f32 %v418, %v419
          %v421 = vrot.slane %v402, 4
          %v422 = vadd.f32 %v402, %v421
          %v423 = vrot.slane %v422, 2
          %v424 = vadd.f32 %v422, %v423
          %v425 = vrot.slane %v424, 1
          %v426 = vadd.f32 %v424, %v425
          %v431 = vsel %vm349, %v414, %v408
          %v432 = vsel %vm351, %v420, %v431
          %v433 = vsel %vm353, %v426, %v432
          %v435 = vsel %vm356, %v433, 0.0
          %436 = vadd.xlane.f32.xlu0 %v435
          %v437 = vpop.xlane.xlu0 %436
          %v439 = vlaneseq
          %v440 = vand.u32 %v439, 127
          %v441 = vlaneseq
          %v442 = vshrl.u32 %v441, 7
          %v443 = vsub.s32 %v440, %v442
          %v444 = vrot.slane %v359, %v443
          %vm446 = vcmask 24576
          %447 = vst.msk [vmem:[%s201] sm:$0x1] %vm446, %v444
          %v449 = vlaneseq
          %v450 = vshrl.u32 %v449, 7
          %v451 = vsub.s32 %v440, %v450
          %v452 = vrot.slane %v398, %v451
          %454 = vst.msk [vmem:[%s201 + $0x1] sm:$0x1] %vm446, %v452
          %v456 = vlaneseq
          %v457 = vshrl.u32 %v456, 7
          %v458 = vsub.s32 %v440, %v457
          %v459 = vrot.slane %v437, %v458
          %461 = vst.msk [vmem:[%s201 + $0x2] sm:$0x1] %vm446, %v459
        $region40: #{tpu_custom_call.1} parent=27 // pred_fallthru
          _
        %p462 = scmp.lt.s32.totalorder %s20, 1
        %s463 = scalar_select %p462, %s20, 1
        %s464 = smul.addr %s463, 4
        %s465 = scalar_lea.vmem %s2, %s464
        // Predicated region
        $region41: #{tpu_custom_call.1} parent=27 // pred_check
          %p466 = pneg %p102
        $region42: #{tpu_custom_call.1} parent=27 // pred_check_branch
          %468 = sbr.rel (%p466) target = $region44
        $region43: #{tpu_custom_call.1} parent=27 // pred_region
          _
        $region44: #{tpu_custom_call.1} parent=27 // pred_fallthru
          _
      $region28: #{tpu_custom_call.1} parent=5 // pred_fallthru
        _
      %p469 = scmp.le.s32.totalorder 2, %s11
      // Predicated region
      $region45: #{tpu_custom_call.1} parent=5 // pred_check
        %p470 = pneg %p469
      $region46: #{tpu_custom_call.1} parent=5 // pred_check_branch
        %472 = sbr.rel (%p470) target = $region48
      $region47: #{tpu_custom_call.1} parent=5 // pred_region
        %s473 = ssub.s32 %s11, 2
        // Predicated region
        $region49: #{tpu_custom_call.1} parent=47 // pred_check
          %p474 = pneg %p108
        $region50: #{tpu_custom_call.1} parent=47 // pred_check_branch
          %476 = sbr.rel (%p474) target = $region52
        $region51: #{tpu_custom_call.1} parent=47 // pred_region
          %p477 = scmp.lt.s32.totalorder %s22, 1
          %s478 = scalar_select %p477, %s22, 1
          %s479 = smul.addr %s478, 4
          %s480 = scalar_lea.vmem %s2, %s479
        $region52: #{tpu_custom_call.1} parent=47 // pred_fallthru
          _
      $region48: #{tpu_custom_call.1} parent=5 // pred_fallthru
        _
    $region6: #{tpu_custom_call.1} parent=1 // loop_footer
      %s15 = sadd.s32 1, %s11
    $region7: #{tpu_custom_call.1} parent=1 // loop_footer_branch
      %10 = sbr.rel target = $region3
    $region8: #{tpu_custom_call.1} parent=1 // loop_exit
      _
    %481 = vsyncpa [#allocation6], 1
    %s482 = scalar_lea.sflag [#allocation6], 1
    %483 = vsyncpa %s482, 1

</llo_original>
